<compile_context>
chip_gen: v5e
topology: v5e:2x2
jax: 0.10.0
libtpu: 0.0.40
codegen_flags: <defaults>
</compile_context>

<pallas_src>
import functools

import jax
import jax.numpy as jnp
from jax.experimental import pallas as pl
from jax.experimental.pallas import tpu as pltpu


# ----------------------------------------------------------------------------
# Helpers
# ----------------------------------------------------------------------------
def _round_up(x, m):
    return ((x + m - 1) // m) * m


def _vmem_capacity_bytes():
    """Trace-time VMEM capacity query with a conservative (v7x) fallback."""
    try:
        info = pltpu.get_tpu_info()
        cap = getattr(info, "vmem_capacity_bytes", None)
        if cap:
            return int(cap)
    except Exception:
        pass
    return 64 * 1024 * 1024


def _sublane_pack(dtype):
    # f32 -> 8, bf16 -> 16, int8/fp8 -> 32 rows per packed vreg tile.
    return max(8, 32 // jnp.dtype(dtype).itemsize)


def _tile_budget_bytes(vmem_cap):
    # ~8 MiB input tiles on 128-MiB-VMEM chips (v5e/v6e), ~6 MiB on v7x (64 MiB).
    return 8 * 1024 * 1024 if vmem_cap >= 128 * 1024 * 1024 else 6 * 1024 * 1024


def _pick_row_tile(n_rows, row_bytes, pack, budget, cap_rows=2048):
    """Pick a row-tile size: multiple of the packed sublane count (or == full
    dim when tiny), budget-limited, and encouraging >=2 steps on the parallel
    grid axis so both v7x TensorCores get work."""
    if n_rows < 8:
        return n_rows  # block dim == full array dim (allowed)
    unit = pack if n_rows >= pack else 8
    by_budget = max(unit, (budget // max(row_bytes, 1)) // unit * unit)
    tile = min(by_budget, cap_rows, (n_rows // unit) * unit)
    if tile >= n_rows and n_rows >= 2 * unit:
        half = max(unit, _round_up((n_rows + 1) // 2, unit))
        tile = min(tile, half, (n_rows // unit) * unit)
    return max(tile, unit)


def _compiler_params(semantics, footprint_bytes, vmem_cap):
    limit = int(min(max(32 << 20, 2 * int(footprint_bytes) + (4 << 20)),
                    (vmem_cap * 3) // 4))
    return pltpu.CompilerParams(dimension_semantics=semantics,
                                vmem_limit_bytes=limit)


# ----------------------------------------------------------------------------
# Gradient reversal (identity forward, -scale * grad backward)
# ----------------------------------------------------------------------------
def _grad_reverse(x, scale):
    @jax.custom_vjp
    def _f(y):
        return y

    def _fwd(y):
        return y, None

    def _bwd(_, g):
        return (-scale * g,)

    _f.defvjp(_fwd, _bwd)
    return _f(x)


# ----------------------------------------------------------------------------
# Kernels
# ----------------------------------------------------------------------------
def _word_kernel(x_ref, w_ref, b_ref, o_ref):
    # x_ref: (TM, H)   w_ref: (H, C)   b_ref: (1, C) f32   o_ref: (TM, C)
    logits = jnp.dot(x_ref[...], w_ref[...], preferred_element_type=jnp.float32)
    o_ref[...] = (logits + b_ref[...]).astype(o_ref.dtype)


def _sent_kernel(x_ref, w_ref, b_ref, o_ref, acc_ref, *,
                 inv_s, seq_len, tile_s, mask_tail):
    # x_ref: (TB, TS, H)   w_ref: (H, C) f32   b_ref: (1, C) f32
    # o_ref: (TB, C)       acc_ref: (TB, H) f32 scratch (sum over seq)
    k = pl.program_id(1)

    @pl.when(k == 0)
    def _init():
        acc_ref[...] = jnp.zeros_like(acc_ref)

    xt = x_ref[...].astype(jnp.float32)
    if mask_tail:
        # Partial seq tail block: mask out-of-range positions before the sum.
        pos = k * tile_s + jax.lax.broadcasted_iota(jnp.int32, xt.shape, 1)
        xt = jnp.where(pos < seq_len, xt, 0.0)
    acc_ref[...] += jnp.sum(xt, axis=1)

    @pl.when(k == pl.num_programs(1) - 1)
    def _finish():
        pooled = acc_ref[...] * inv_s  # mean over true seq length
        logits = jnp.dot(pooled, w_ref[...], preferred_element_type=jnp.float32)
        o_ref[...] = (logits + b_ref[...]).astype(o_ref.dtype)


# ----------------------------------------------------------------------------
# Wrapper ("Discriminator.forward")
# ----------------------------------------------------------------------------
def discriminator_forward(x, w, b, *, level="sent", grad_reverse=False, scale=1.0):
    """x: (B, S, H), w: (H, C), b: (C,)."""
    assert x.ndim == 3
    if grad_reverse:
        x = _grad_reverse(x, scale)  # identity in the forward pass

    B, S, H = x.shape
    H_w, C = w.shape
    assert H_w == H

    itemsize = jnp.dtype(x.dtype).itemsize
    pack = _sublane_pack(x.dtype)
    vmem_cap = _vmem_capacity_bytes()
    budget = _tile_budget_bytes(vmem_cap)

    b_f32 = b.reshape(1, C).astype(jnp.float32)

    if level == "sent":
        w_f32 = w.astype(jnp.float32)

        # Batch tile (parallel axis): keep the f32 accumulator small.
        TILE_B = _pick_row_tile(B, row_bytes=H * 4, pack=pack,
                                budget=1 << 20, cap_rows=128)
        # Seq tile (reduction axis): fill the input-tile budget.
        if S < 8:
            TILE_S = S
        else:
            unit_s = pack if S >= pack else 8
            s_rows = max(unit_s,
                         (budget // max(TILE_B * H * itemsize, 1)) // unit_s * unit_s)
            TILE_S = min(s_rows, 1024, (S // unit_s) * unit_s)

        grid = (pl.cdiv(B, TILE_B), pl.cdiv(S, TILE_S))
        mask_tail = (S % TILE_S) != 0

        footprint = (2 * TILE_B * TILE_S * H * itemsize    # double-buffered x tile
                     + H * C * 4 + C * 4                   # resident w, b (f32)
                     + 2 * TILE_B * C * itemsize           # out tile
                     + TILE_B * H * 4)                     # acc scratch

        kernel = functools.partial(_sent_kernel, inv_s=1.0 / S, seq_len=S,
                                   tile_s=TILE_S, mask_tail=mask_tail)
        cost = pl.CostEstimate(
            flops=int(B * S * H + 2 * B * H * C + B * C),
            transcendentals=0,
            bytes_accessed=int(B * S * H * itemsize + H * C * 4
                               + B * C * itemsize + C * 4))

        return pl.pallas_call(
            kernel,
            out_shape=jax.ShapeDtypeStruct((B, C), x.dtype),
            grid_spec=pltpu.PrefetchScalarGridSpec(
                num_scalar_prefetch=0,
                grid=grid,                                    # seq reduction axis last
                in_specs=[
                    pl.BlockSpec((TILE_B, TILE_S, H), lambda i, k: (i, k, 0)),
                    pl.BlockSpec((H, C), lambda i, k: (0, 0)),    # resident
                    pl.BlockSpec((1, C), lambda i, k: (0, 0)),    # resident
                ],
                out_specs=pl.BlockSpec((TILE_B, C), lambda i, k: (i, 0)),
                scratch_shapes=[pltpu.VMEM((TILE_B, H), jnp.float32)],
            ),
            compiler_params=_compiler_params(("parallel", "arbitrary"),
                                             footprint, vmem_cap),
            cost_estimate=cost,
        )(x, w_f32, b_f32)

    # ---- word level: flatten (B, S) -> rows, one big 2-D matmul per tile ----
    N = B * S
    x2 = x.reshape(N, H)  # free (metadata-only) reshape

    TILE_M = _pick_row_tile(N, row_bytes=H * itemsize, pack=pack,
                            budget=budget, cap_rows=2048)
    grid = (pl.cdiv(N, TILE_M),)

    w_itemsize = jnp.dtype(w.dtype).itemsize
    footprint = (2 * TILE_M * H * itemsize            # double-buffered x tile
                 + H * C * w_itemsize + C * 4         # resident w, b
                 + 2 * TILE_M * C * itemsize)         # out tile

    cost = pl.CostEstimate(
        flops=int(2 * N * H * C + N * C),
        transcendentals=0,
        bytes_accessed=int(N * H * itemsize + H * C * w_itemsize
                           + N * C * itemsize + C * 4))

    out = pl.pallas_call(
        _word_kernel,
        out_shape=jax.ShapeDtypeStruct((N, C), x.dtype),
        grid_spec=pltpu.PrefetchScalarGridSpec(
            num_scalar_prefetch=0,
            grid=grid,
            in_specs=[
                pl.BlockSpec((TILE_M, H), lambda i: (i, 0)),
                pl.BlockSpec((H, C), lambda i: (0, 0)),       # resident
                pl.BlockSpec((1, C), lambda i: (0, 0)),       # resident
            ],
            out_specs=pl.BlockSpec((TILE_M, C), lambda i: (i, 0)),
        ),
        compiler_params=_compiler_params(("parallel",), footprint, vmem_cap),
        cost_estimate=cost,
    )(x2, w, b_f32)
    return out.reshape(B, S, C)


# ----------------------------------------------------------------------------
# Pure-JAX reference for verification
# ----------------------------------------------------------------------------
def _reference(x, w, b, *, level="sent"):
    out = x
    if level == "sent":
        out = jnp.mean(out, axis=1)
    return out @ w + b


if __name__ == "__main__":
    # Small shapes consistent with a 3-D (batch, seq, hidden) discriminator input
    B, S, H, C = 2, 8, 32, 4
    key = jax.random.PRNGKey(0)
    kx, kw, kb = jax.random.split(key, 3)

    x = jax.random.normal(kx, (B, S, H), dtype=jnp.float32)
    # Deterministic synthetic classifier-head parameters
    w = jax.random.normal(kw, (H, C), dtype=jnp.float32) * 0.1
    b = jax.random.normal(kb, (C,), dtype=jnp.float32) * 0.1

    # sent-level path (mean over seq, then linear head)
    out_sent = discriminator_forward(x, w, b, level="sent", grad_reverse=True, scale=1.0)
    out_sent = jax.block_until_ready(out_sent)
    ref_sent = _reference(x, w, b, level="sent")
    assert out_sent.shape == (B, C)
    assert jnp.allclose(out_sent, ref_sent, atol=1e-4, rtol=1e-4)

    # word-level path (per-token linear head)
    out_word = discriminator_forward(x, w, b, level="word")
    out_word = jax.block_until_ready(out_word)
    ref_word = _reference(x, w, b, level="word")
    assert out_word.shape == (B, S, C)
    assert jnp.allclose(out_word, ref_word, atol=1e-4, rtol=1e-4)

    print("KERNEL_OK")
</pallas_src>

<mosaic_0001>
module attributes {stable_mosaic.version = 11 : i64} {
  func.func @_sent_kernel(%arg0: i32, %arg1: i32, %arg2: memref<2x8x32xf32, #tpu.memory_space<vmem>>, %arg3: memref<32x4xf32, #tpu.memory_space<vmem>>, %arg4: memref<1x4xf32, #tpu.memory_space<vmem>>, %arg5: memref<2x4xf32, #tpu.memory_space<vmem>>, %arg6: memref<2x32xf32, #tpu.memory_space<vmem>>) attributes {dimension_semantics = [#tpu.dimension_semantics<parallel>, #tpu.dimension_semantics<arbitrary>], iteration_bounds = array<i64: 1, 1>, scalar_prefetch = 0 : i64, scratch_operands = 1 : i64, tpu.core_type = #tpu.core_type<tc>, window_params = [{transform_indices = @transform_0, window_bounds = array<i64: 2, 8, 32>}, {pipeline_mode = #tpu.pipeline_mode<synchronous>, transform_indices = @transform_1, window_bounds = array<i64: 32, 4>}, {pipeline_mode = #tpu.pipeline_mode<synchronous>, transform_indices = @transform_2, window_bounds = array<i64: 1, 4>}, {transform_indices = @transform_3, window_bounds = array<i64: 2, 4>}]} {
    %c0_i32 = arith.constant 0 : i32
    %0 = arith.cmpi eq, %arg1, %c0_i32 : i32
    %1 = arith.extui %0 : i1 to i32
    %c0_i32_0 = arith.constant 0 : i32
    %2 = arith.cmpi ne, %1, %c0_i32_0 : i32
    scf.if %2 {
      %cst_9 = arith.constant 0.000000e+00 : f32
      %11 = vector.broadcast %cst_9 : f32 to vector<2x32xf32>
      %c0_10 = arith.constant 0 : index
      %c0_11 = arith.constant 0 : index
      %12 = vector.load %arg6[%c0_10, %c0_11] : memref<2x32xf32, #tpu.memory_space<vmem>>, vector<2x32xf32>
      tpu.vector_store %arg6[%c0_10, %c0_11], %11 {strides = array<i32>} : memref<2x32xf32, #tpu.memory_space<vmem>>, vector<2x32xf32>,
    } else {
    }
    %c0 = arith.constant 0 : index
    %c0_1 = arith.constant 0 : index
    %c0_2 = arith.constant 0 : index
    %3 = vector.load %arg2[%c0, %c0_1, %c0_2] : memref<2x8x32xf32, #tpu.memory_space<vmem>>, vector<2x8x32xf32>
    %c0_3 = arith.constant 0 : index
    %c0_4 = arith.constant 0 : index
    %4 = vector.load %arg6[%c0_3, %c0_4] : memref<2x32xf32, #tpu.memory_space<vmem>>, vector<2x32xf32>
    %cst = arith.constant dense<0.000000e+00> : vector<2x32xf32>
    %5 = vector.multi_reduction <add>, %3, %cst [1] : vector<2x8x32xf32> to vector<2x32xf32>
    %6 = arith.addf %4, %5 : vector<2x32xf32>
    %c0_5 = arith.constant 0 : index
    %c0_6 = arith.constant 0 : index
    %7 = vector.load %arg6[%c0_5, %c0_6] : memref<2x32xf32, #tpu.memory_space<vmem>>, vector<2x32xf32>
    tpu.vector_store %arg6[%c0_5, %c0_6], %6 {strides = array<i32>} : memref<2x32xf32, #tpu.memory_space<vmem>>, vector<2x32xf32>,
    %c0_i32_7 = arith.constant 0 : i32
    %8 = arith.cmpi eq, %arg1, %c0_i32_7 : i32
    %9 = arith.extui %8 : i1 to i32
    %c0_i32_8 = arith.constant 0 : i32
    %10 = arith.cmpi ne, %9, %c0_i32_8 : i32
    scf.if %10 {
      %c0_9 = arith.constant 0 : index
      %c0_10 = arith.constant 0 : index
      %11 = vector.load %arg6[%c0_9, %c0_10] : memref<2x32xf32, #tpu.memory_space<vmem>>, vector<2x32xf32>
      %cst_11 = arith.constant 1.250000e-01 : f32
      %12 = vector.broadcast %cst_11 : f32 to vector<2x32xf32>
      %13 = arith.mulf %11, %12 : vector<2x32xf32>
      %c0_12 = arith.constant 0 : index
      %c0_13 = arith.constant 0 : index
      %14 = vector.load %arg3[%c0_12, %c0_13] : memref<32x4xf32, #tpu.memory_space<vmem>>, vector<32x4xf32>
      %cst_14 = arith.constant dense<0.000000e+00> : vector<2x4xf32>
      %15 = tpu.matmul %13, %14, %cst_14 {dimension_numbers = #tpu.dot_dimension_numbers<[1], [0], [0], [1], [0, 0, 1, 1], [], []>} : vector<2x32xf32>, vector<32x4xf32>, vector<2x4xf32> -> vector<2x4xf32>
      %c0_15 = arith.constant 0 : index
      %c0_16 = arith.constant 0 : index
      %16 = vector.load %arg4[%c0_15, %c0_16] : memref<1x4xf32, #tpu.memory_space<vmem>>, vector<1x4xf32>
      %17 = vector.broadcast %16 : vector<1x4xf32> to vector<2x4xf32>
      %18 = arith.addf %15, %17 : vector<2x4xf32>
      %c0_17 = arith.constant 0 : index
      %c0_18 = arith.constant 0 : index
      %19 = vector.load %arg5[%c0_17, %c0_18] : memref<2x4xf32, #tpu.memory_space<vmem>>, vector<2x4xf32>
      tpu.vector_store %arg5[%c0_17, %c0_18], %18 {strides = array<i32>} : memref<2x4xf32, #tpu.memory_space<vmem>>, vector<2x4xf32>,
    } else {
    }
    return
  }
  func.func @transform_0(%arg0: i32, %arg1: i32) -> (i32, i32, i32) {
    %c0_i32 = arith.constant 0 : i32
    %c0_i32_0 = arith.constant 0 : i32
    return %arg0, %arg1, %c0_i32 : i32, i32, i32
  }
  func.func @transform_1(%arg0: i32, %arg1: i32) -> (i32, i32) {
    %c0_i32 = arith.constant 0 : i32
    %c0_i32_0 = arith.constant 0 : i32
    %c0_i32_1 = arith.constant 0 : i32
    return %c0_i32, %c0_i32_0 : i32, i32
  }
  func.func @transform_2(%arg0: i32, %arg1: i32) -> (i32, i32) {
    %c0_i32 = arith.constant 0 : i32
    %c0_i32_0 = arith.constant 0 : i32
    %c0_i32_1 = arith.constant 0 : i32
    return %c0_i32, %c0_i32_0 : i32, i32
  }
  func.func @transform_3(%arg0: i32, %arg1: i32) -> (i32, i32) {
    %c0_i32 = arith.constant 0 : i32
    %c0_i32_0 = arith.constant 0 : i32
    return %arg0, %c0_i32 : i32, i32
  }
}

</mosaic_0001>

<llo_original>
// kernel: tpu_custom_call.1
$region0: #{tpu_custom_call.1}
  #allocation0 [shape = 'u32[]', space=smem, size = 0x4, offset = 0x4, fixed_abs, tag = 'smem constant byte address 0x4 - core index']
  #allocation1 [shape = 'u32[72,128]{1,0:T(1,128)}', space=vmem, size = 0x9000, scoped, tag = 'internal scratch']
  #allocation2 [shape = 'f32[2,32]{1,0:T(2,128)}', space=vmem, size = 0x400, scoped, tag = 'scratch operand']
  %s0 = inlined_call_operand.vmem [shape: f32[2,8,32], index: 0, kind: input, shape index: {}]
  %s1 = inlined_call_operand.vmem [shape: f32[32,4], index: 1, kind: input, shape index: {}]
  %s2 = inlined_call_operand.vmem [shape: f32[1,4], index: 2, kind: input, shape index: {}]
  %s3 = inlined_call_operand.hbm [shape: f32[2,4], index: 3, kind: output, shape index: {}]
  %s4 = sld [smem:[#allocation0]]
  $region30: #{tpu_custom_call.1} parent=0
    _
  %s6 = ssub.s32 1, %s4
  %s7 = scalar_select 0, %s6, %s4
  $region1: #{tpu_custom_call.1} parent=0
    #allocation3 [shape = 'u8[1024]{0}', space=vmem, size = 0x400, scoped, tag = 'output window, operand 0, single buffered']
    #allocation4 [shape = 's32[1]{0}', space=sflag, size = 0x4, scoped, tag = 'scoped memory for tpu_custom_call.1']
    %8 = vsyncpa [#allocation4], 0
    // Predicated region
    $region2: #{tpu_custom_call.1} parent=1 // pred_check
      _
    $region3: #{tpu_custom_call.1} parent=1 // pred_check_branch
      %10 = sbr.rel (0) target = $region5
    $region4: #{tpu_custom_call.1} parent=1 // pred_region
      _
    $region5: #{tpu_custom_call.1} parent=1 // pred_fallthru
      _
    // Predicated region
    $region6: #{tpu_custom_call.1} parent=1 // pred_check
      _
    $region7: #{tpu_custom_call.1} parent=1 // pred_check_branch
      %12 = sbr.rel (0) target = $region9
    $region8: #{tpu_custom_call.1} parent=1 // pred_region
      _
    $region9: #{tpu_custom_call.1} parent=1 // pred_fallthru
      _
    // Predicated region
    $region10: #{tpu_custom_call.1} parent=1 // pred_check
      _
    $region11: #{tpu_custom_call.1} parent=1 // pred_check_branch
      %14 = sbr.rel (0) target = $region13
    $region12: #{tpu_custom_call.1} parent=1 // pred_region
      _
    $region13: #{tpu_custom_call.1} parent=1 // pred_fallthru
      _
    %p15 = scmp.eq.s32.totalorder 0, 0
    // Predicated region
    $region14: #{tpu_custom_call.1} parent=1 // pred_check
      %p16 = pneg %p15
    $region15: #{tpu_custom_call.1} parent=1 // pred_check_branch
      %18 = sbr.rel (%p16) target = $region17
    $region16: #{tpu_custom_call.1} parent=1 // pred_region
      %vm19 = vcmask 254976
      %20 = vst.msk [vmem:[#allocation2] sm:$0x3] %vm19, 0.0
    $region17: #{tpu_custom_call.1} parent=1 // pred_fallthru
      _
    %v21 = vld [vmem:[%s0] sm:$0xff]
    %v22 = vld [vmem:[%s0 + $0x8] sm:$0xff]
    %v23 = vld [vmem:[#allocation2] sm:$0x3]
    %vm24 = vcmask 261120
    %v25 = vsel %vm24, %v21, 0.0
    %v26 = vrot.slane %v25, 4
    %v27 = vadd.f32 %v25, %v26
    %v28 = vrot.slane %v27, 2
    %v29 = vadd.f32 %v27, %v28
    %v30 = vrot.slane %v29, 1
    %v31 = vadd.f32 %v29, %v30
    %v32 = vsel %vm24, %v22, 0.0
    %v33 = vrot.slane %v32, 4
    %v34 = vadd.f32 %v32, %v33
    %v35 = vrot.slane %v34, 2
    %v36 = vadd.f32 %v34, %v35
    %v37 = vrot.slane %v36, 1
    %v38 = vadd.f32 %v36, %v37
    %vm41 = vcmask 1041409
    %v42 = vsel %vm41, %v38, %v31
    %v44 = vadd.f32 %v23, %v42
    %vm45 = vcmask 254976
    %46 = vst.msk [vmem:[#allocation2] sm:$0x3] %vm45, %v44
    // Predicated region
    $region18: #{tpu_custom_call.1} parent=1 // pred_check
      %p47 = pneg %p15
    $region19: #{tpu_custom_call.1} parent=1 // pred_check_branch
      %49 = sbr.rel (%p47) target = $region21
    $region20: #{tpu_custom_call.1} parent=1 // pred_region
      %v50 = vld [vmem:[#allocation2] sm:$0x3]
      %v51 = vmul.f32 %v50, 0.125
      %v52 = vld [vmem:[%s1] sm:$0xff]
      %v53 = vld [vmem:[%s1 + $0x8] sm:$0xff]
      %v54 = vld [vmem:[%s1 + $0x10] sm:$0xff]
      %v55 = vld [vmem:[%s1 + $0x18] sm:$0xff]
      %v56 = vld [vmem:[%s2] sm:$0x1]
      %v58 = vperm.slane %v56, 0
      %v61 = vsel %vm24, %v51, 0
      %63 = vmatpush.msra.mxu0 0.0
      %64 = vmatpush.msra.mxu0 0.0
      %65 = vmatpush.msra.mxu0 0.0
      %66 = vmatpush.msra.mxu0 0.0
      %67 = vmatpush.msra.mxu0 0.0
      %68 = vmatpush.msra.mxu0 0.0
      %69 = vmatpush.msra.mxu0 0.0
      %70 = vmatpush.msra.mxu0 0.0
      %71 = vmatpush.msra.mxu0 0.0
      %72 = vmatpush.msra.mxu0 0.0
      %73 = vmatpush.msra.mxu0 0.0
      %74 = vmatpush.msra.mxu0 0.0
      %75 = vmatpush.msra.mxu0 %v55
      %76 = vmatpush.msra.mxu0 %v54
      %77 = vmatpush.msra.mxu0 %v53
      %78 = vmatpush.msra.mxu0 %v52
      %79 = vmatmul.f32.gmra.mxu0 %v61
      %v80 = vpop.f32.mrf.mxu0
      %v81 = vadd.f32 %v58, %v80
      %82 = vdwg.mxu0
      %vm83 = vcmask 25600
      %84 = vst.msk [vmem:[#allocation3] sm:$0x3] %vm83, %v81
    $region21: #{tpu_custom_call.1} parent=1 // pred_fallthru
      _
    // Predicated region
    $region22: #{tpu_custom_call.1} parent=1 // pred_check
      _
    $region23: #{tpu_custom_call.1} parent=1 // pred_check_branch
      %86 = sbr.rel (0) target = $region25
    $region24: #{tpu_custom_call.1} parent=1 // pred_region
      %88 = vsyncadd [#allocation4], 0
      %s90 = sshll.u32 [#allocation3], 4
      %s91 = int_to_ptr.vmem [resolvable:$true] %s90
      %s92 = sshll.u32 %s3, 4
      %s93 = int_to_ptr.hbm [resolvable:$true] %s92
      %95 = dma.vmem_to_hbm [thread:$0]  %s91, 32, %s93, [#allocation4]
    $region25: #{tpu_custom_call.1} parent=1 // pred_fallthru
      _
    // Predicated region
    $region26: #{tpu_custom_call.1} parent=1 // pred_check
      _
    $region27: #{tpu_custom_call.1} parent=1 // pred_check_branch
      %97 = sbr.rel (0) target = $region29
    $region28: #{tpu_custom_call.1} parent=1 // pred_region
      %99 = dma.done [#allocation4], 32
    $region29: #{tpu_custom_call.1} parent=1 // pred_fallthru
      _
    %100 = vsyncpa [#allocation4], 1

</llo_original>
